<compile_context>
chip_gen: v5e
topology: v5e:2x2
jax: 0.10.0
libtpu: 0.0.40
codegen_flags: <defaults>
</compile_context>

<pallas_src>
import functools

import jax
import jax.numpy as jnp
from jax.experimental import pallas as pl
from jax.experimental.pallas import tpu as pltpu

RESI_MIN = 1e-4
RESI_MAX = 1000.0
STD_MIN = 1e-5
CORR_WEIGHT = 1e-4

GRIDLESS_MAX_N = 16384      # below this: launch/DMA-bound -> gridless path
DEFAULT_TILE_N = 65536      # streaming batch tile (pred block ~2.6 MB f32)


def _resi_rows(pred_f32, tgt_i32):
    """Per-sample clipped CE of softmax(pred) vs target.  Shapes: (R,C),(R,1)->(R,1)."""
    R, C = pred_f32.shape
    # pred = pred.softmax(dim=1)
    m = jnp.max(pred_f32, axis=1, keepdims=True)                     # (R, 1)
    e = jnp.exp(pred_f32 - m)                                        # (R, C)
    inv_rowsum = 1.0 / jnp.sum(e, axis=1, keepdims=True)             # (R, 1) exact
    p = e * inv_rowsum                                               # (R, C)
    # resi = CrossEntropyLoss(reduction='none')(p, target)
    # PyTorch CE log-softmaxes its *input*, which here is the softmax output p
    # (faithful to the original module -- do not "fix").  p in (0,1] so
    # exp(p) in [1, e]: no max-shift needed.
    lse = jnp.log(jnp.sum(jnp.exp(p), axis=1, keepdims=True))        # (R, 1)
    cls = jax.lax.broadcasted_iota(jnp.int32, (R, C), 1)
    p_t = jnp.sum(jnp.where(cls == tgt_i32, p, 0.0), axis=1, keepdims=True)
    return jnp.clip(lse - p_t, RESI_MIN, RESI_MAX)                   # (R, 1)


# ----------------------------------------------------------------------------
# Gridless kernel: small N (CIFAR scale), whole problem in VMEM, natural layout.
# ----------------------------------------------------------------------------
def _pcc_gridless_kernel(pred_ref, unc_ref, tgt_ref, out_ref):
    pred = pred_ref[...].astype(jnp.float32)     # (N, C), in-kernel upcast
    unc = unc_ref[...].astype(jnp.float32)       # (N, 1)
    tgt = tgt_ref[...]                           # (N, 1) i32
    N = pred.shape[0]
    inv_n = jnp.float32(1.0 / N)
    inv_nm1 = jnp.float32(1.0 / max(N - 1, 1))   # N==1: corr=0 (torch would be NaN)

    resi = _resi_rows(pred, tgt)                 # (N, 1)

    # cov = mean((resi - resi.mean) * (unc - unc.mean))
    sr = jnp.sum(resi, axis=0, keepdims=True)                        # (1, 1)
    su = jnp.sum(unc, axis=0, keepdims=True)                         # (1, 1)
    rc = resi - sr * inv_n
    uc = unc - su * inv_n
    cov = jnp.sum(rc * uc, axis=0, keepdims=True) * inv_n            # (1, 1)

    # corr = cov / clamp(resi.std() * unc.std(), min=1e-5)   (unbiased std)
    var_r = jnp.sum(rc * rc, axis=0, keepdims=True) * inv_nm1
    var_u = jnp.sum(uc * uc, axis=0, keepdims=True) * inv_nm1
    denom = jnp.maximum(jnp.sqrt(var_r * var_u), STD_MIN)
    corr = cov / denom                                               # (1, 1)

    # l = mean(resi + w*(1-corr)) == mean(resi) + w*(1-corr)
    loss = sr * inv_n + CORR_WEIGHT * (1.0 - corr)                   # (1, 1)

    lane = jax.lax.broadcasted_iota(jnp.int32, (1, 2), 1)
    out_ref[...] = jnp.where(lane == 0, loss, corr)


def _pcc_gridless(pred, unc, tgt):
    out = pl.pallas_call(
        _pcc_gridless_kernel,
        out_shape=jax.ShapeDtypeStruct((1, 2), jnp.float32),
        in_specs=[pl.BlockSpec(memory_space=pltpu.MemorySpace.VMEM)] * 3,
        out_specs=pl.BlockSpec(memory_space=pltpu.MemorySpace.VMEM),
    )(pred, unc, tgt)
    return out[0, 0], out[0, 1]


# ----------------------------------------------------------------------------
# Streaming kernel: grid over batch tiles, O(tile_n) VMEM, shifted running sums.
# ----------------------------------------------------------------------------
def _pcc_streaming_kernel(pred_ref, unc_ref, tgt_ref, out_ref,
                          r0_ref, u0_ref, sr_ref, su_ref, srr_ref, suu_ref,
                          sru_ref, *, n_total, tile_n):
    i = pl.program_id(0)
    pred = pred_ref[...].astype(jnp.float32)     # (tile_n, C)
    unc = unc_ref[...].astype(jnp.float32)       # (tile_n, 1)
    tgt = tgt_ref[...]                           # (tile_n, 1) i32

    resi = _resi_rows(pred, tgt)                 # (tile_n, 1)

    # Mask the padded rows of a ragged last tile before any batch reduction.
    row = jax.lax.broadcasted_iota(jnp.int32, (tile_n, 1), 0)
    valid = (row + i * tile_n) < n_total         # (tile_n, 1) bool

    @pl.when(i == 0)
    def _init():
        n0 = min(tile_n, n_total)                # static: first tile valid count
        inv_n0 = jnp.float32(1.0 / n0)
        # Shift by the first tile's means so the running sums are near zero
        # mean (avoids E[x^2]-E[x]^2 catastrophic cancellation).
        r0_ref[...] = jnp.sum(jnp.where(valid, resi, 0.0), axis=0,
                              keepdims=True) * inv_n0
        u0_ref[...] = jnp.sum(jnp.where(valid, unc, 0.0), axis=0,
                              keepdims=True) * inv_n0
        sr_ref[...] = jnp.zeros_like(sr_ref)
        su_ref[...] = jnp.zeros_like(su_ref)
        srr_ref[...] = jnp.zeros_like(srr_ref)
        suu_ref[...] = jnp.zeros_like(suu_ref)
        sru_ref[...] = jnp.zeros_like(sru_ref)

    r0 = r0_ref[...]                             # (1, 1)
    u0 = u0_ref[...]                             # (1, 1)
    dr = jnp.where(valid, resi - r0, 0.0)        # (tile_n, 1)
    du = jnp.where(valid, unc - u0, 0.0)
    sr_ref[...] += jnp.sum(dr, axis=0, keepdims=True)
    su_ref[...] += jnp.sum(du, axis=0, keepdims=True)
    srr_ref[...] += jnp.sum(dr * dr, axis=0, keepdims=True)
    suu_ref[...] += jnp.sum(du * du, axis=0, keepdims=True)
    sru_ref[...] += jnp.sum(dr * du, axis=0, keepdims=True)

    @pl.when(i == pl.num_programs(0) - 1)
    def _finalize():
        inv_n = jnp.float32(1.0 / n_total)
        inv_nm1 = jnp.float32(1.0 / max(n_total - 1, 1))
        sr = sr_ref[...]
        su = su_ref[...]
        mean_r = r0 + sr * inv_n
        cov = (sru_ref[...] - sr * su * inv_n) * inv_n
        var_r = jnp.maximum((srr_ref[...] - sr * sr * inv_n) * inv_nm1, 0.0)
        var_u = jnp.maximum((suu_ref[...] - su * su * inv_n) * inv_nm1, 0.0)
        denom = jnp.maximum(jnp.sqrt(var_r * var_u), STD_MIN)
        corr = cov / denom
        loss = mean_r + CORR_WEIGHT * (1.0 - corr)
        lane = jax.lax.broadcasted_iota(jnp.int32, (1, 2), 1)
        out_ref[...] = jnp.where(lane == 0, loss, corr)


def _pcc_streaming(pred, unc, tgt, tile_n):
    N, C = pred.shape
    tile_n = max(8, (tile_n // 8) * 8)           # second-minor block dim: mult of 8
    num_tiles = pl.cdiv(N, tile_n)
    kernel = functools.partial(_pcc_streaming_kernel, n_total=N, tile_n=tile_n)
    grid_spec = pltpu.PrefetchScalarGridSpec(
        num_scalar_prefetch=0,
        grid=(num_tiles,),
        in_specs=[
            pl.BlockSpec((tile_n, C), lambda i: (i, 0)),
            pl.BlockSpec((tile_n, 1), lambda i: (i, 0)),
            pl.BlockSpec((tile_n, 1), lambda i: (i, 0)),
        ],
        out_specs=pl.BlockSpec((1, 2), lambda i: (0, 0)),
        scratch_shapes=[pltpu.VMEM((1, 1), jnp.float32) for _ in range(7)],
    )
    out = pl.pallas_call(
        kernel,
        out_shape=jax.ShapeDtypeStruct((1, 2), jnp.float32),
        grid_spec=grid_spec,
        compiler_params=pltpu.CompilerParams(
            dimension_semantics=("arbitrary",)),   # batch-accumulation axis
    )(pred, unc, tgt)
    return out[0, 0], out[0, 1]


def pcc_loss(pred, pred_unc, target, *, tile_n=DEFAULT_TILE_N,
             force_streaming=False):
    """Returns (loss, corr) scalars matching PCCLoss(reduction='mean').

    pred: (N, C) logits, natural layout, native dtype (f32 or bf16).
    pred_unc: (N, 1) or (N,), native dtype.  target: (N,) int labels.
    """
    N, C = pred.shape
    unc = pred_unc.reshape(N, 1)                 # native dtype kept (no astype)
    tgt = target.astype(jnp.int32).reshape(N, 1)
    if force_streaming or N > GRIDLESS_MAX_N:
        return _pcc_streaming(pred, unc, tgt, tile_n)
    return _pcc_gridless(pred, unc, tgt)


def _pcc_loss_ref(pred, pred_unc, target):
    # Pure-JAX reference mirroring the PyTorch forward.
    N, C = pred.shape
    p = jax.nn.softmax(pred.astype(jnp.float32), axis=1)
    logp = jax.nn.log_softmax(p, axis=1)
    resi = -jnp.take_along_axis(logp, target.astype(jnp.int32)[:, None], axis=1)[:, 0]
    resi = jnp.clip(resi, RESI_MIN, RESI_MAX)
    unc = pred_unc.astype(jnp.float32).reshape(N)
    cov = jnp.mean((resi - resi.mean()) * (unc - unc.mean()))
    resi_std = jnp.std(resi, ddof=1)
    unc_std = jnp.std(unc, ddof=1)
    corr = cov / jnp.maximum(resi_std * unc_std, STD_MIN)
    l = jnp.mean(resi + CORR_WEIGHT * (1.0 - corr))
    return l, corr


if __name__ == "__main__":
    C = 10  # CIFAR-10-like

    # Case 1: small f32 batch -> gridless path, natural (N, C) layout.
    key = jax.random.PRNGKey(0)
    k1, k2, k3 = jax.random.split(key, 3)
    N = 32
    pred = jax.random.normal(k1, (N, C), dtype=jnp.float32)
    pred_unc = jax.random.uniform(k2, (N, 1), dtype=jnp.float32)
    target = jax.random.randint(k3, (N,), 0, C, dtype=jnp.int32)
    loss, corr = jax.block_until_ready(pcc_loss(pred, pred_unc, target))
    loss_ref, corr_ref = _pcc_loss_ref(pred, pred_unc, target)
    assert jnp.allclose(loss, loss_ref, rtol=1e-5, atol=1e-5), (loss, loss_ref)
    assert jnp.allclose(corr, corr_ref, rtol=1e-5, atol=1e-5), (corr, corr_ref)

    # Case 2: native bf16 inputs (no wrapper astype), in-kernel upcast.
    pred_bf = pred.astype(jnp.bfloat16)
    unc_bf = pred_unc.astype(jnp.bfloat16)
    loss2, corr2 = jax.block_until_ready(pcc_loss(pred_bf, unc_bf, target))
    loss2_ref, corr2_ref = _pcc_loss_ref(pred_bf, unc_bf, target)
    assert jnp.allclose(loss2, loss2_ref, rtol=1e-5, atol=1e-5), (loss2, loss2_ref)
    assert jnp.allclose(corr2, corr2_ref, rtol=1e-5, atol=1e-5), (corr2, corr2_ref)

    # Case 3: streaming grid path with a ragged last tile (padding-mask check).
    k4, k5, k6 = jax.random.split(jax.random.PRNGKey(1), 3)
    N3 = 300
    pred3 = jax.random.normal(k4, (N3, C), dtype=jnp.float32)
    unc3 = jax.random.uniform(k5, (N3, 1), dtype=jnp.float32)
    tgt3 = jax.random.randint(k6, (N3,), 0, C, dtype=jnp.int32)
    loss3, corr3 = jax.block_until_ready(
        pcc_loss(pred3, unc3, tgt3, tile_n=128, force_streaming=True))
    loss3_ref, corr3_ref = _pcc_loss_ref(pred3, unc3, tgt3)
    assert jnp.allclose(loss3, loss3_ref, rtol=1e-5, atol=1e-5), (loss3, loss3_ref)
    assert jnp.allclose(corr3, corr3_ref, rtol=1e-5, atol=1e-5), (corr3, corr3_ref)

    print("KERNEL_OK")
</pallas_src>

<mosaic_0001>
module attributes {stable_mosaic.version = 11 : i64} {
  func.func @_pcc_gridless_kernel(%arg0: memref<32x10xf32, #tpu.memory_space<vmem>>, %arg1: memref<32x1xf32, #tpu.memory_space<vmem>>, %arg2: memref<32x1xi32, #tpu.memory_space<vmem>>, %arg3: memref<1x2xf32, #tpu.memory_space<vmem>>) attributes {dimension_semantics = [], scalar_prefetch = 0 : i64, scratch_operands = 0 : i64, tpu.core_type = #tpu.core_type<tc>} {
    %c0 = arith.constant 0 : index
    %c0_0 = arith.constant 0 : index
    %0 = vector.load %arg0[%c0, %c0_0] : memref<32x10xf32, #tpu.memory_space<vmem>>, vector<32x10xf32>
    %c0_1 = arith.constant 0 : index
    %c0_2 = arith.constant 0 : index
    %1 = vector.load %arg1[%c0_1, %c0_2] : memref<32x1xf32, #tpu.memory_space<vmem>>, vector<32x1xf32>
    %c0_3 = arith.constant 0 : index
    %c0_4 = arith.constant 0 : index
    %2 = vector.load %arg2[%c0_3, %c0_4] : memref<32x1xi32, #tpu.memory_space<vmem>>, vector<32x1xi32>
    %cst = arith.constant dense<0xFF800000> : vector<32xf32>
    %3 = vector.multi_reduction <maximumf>, %0, %cst [1] : vector<32x10xf32> to vector<32xf32>
    %4 = vector.shape_cast %3 : vector<32xf32> to vector<32x1xf32>
    %5 = vector.broadcast %4 : vector<32x1xf32> to vector<32x10xf32>
    %6 = arith.subf %0, %5 : vector<32x10xf32>
    %7 = math.exp %6 : vector<32x10xf32>
    %cst_5 = arith.constant dense<0.000000e+00> : vector<32xf32>
    %8 = vector.multi_reduction <add>, %7, %cst_5 [1] : vector<32x10xf32> to vector<32xf32>
    %9 = vector.shape_cast %8 : vector<32xf32> to vector<32x1xf32>
    %cst_6 = arith.constant 1.000000e+00 : f32
    %10 = vector.broadcast %cst_6 : f32 to vector<32x1xf32>
    %11 = arith.divf %10, %9 : vector<32x1xf32>
    %12 = vector.broadcast %11 : vector<32x1xf32> to vector<32x10xf32>
    %13 = arith.mulf %7, %12 : vector<32x10xf32>
    %14 = math.exp %13 : vector<32x10xf32>
    %cst_7 = arith.constant dense<0.000000e+00> : vector<32xf32>
    %15 = vector.multi_reduction <add>, %14, %cst_7 [1] : vector<32x10xf32> to vector<32xf32>
    %16 = vector.shape_cast %15 : vector<32xf32> to vector<32x1xf32>
    %17 = math.log %16 : vector<32x1xf32>
    %18 = tpu.iota {dimensions = array<i32: 1>} : vector<32x10xi32>
    %19 = vector.broadcast %2 : vector<32x1xi32> to vector<32x10xi32>
    %20 = arith.cmpi eq, %18, %19 : vector<32x10xi32>
    %cst_8 = arith.constant 0.000000e+00 : f32
    %21 = vector.broadcast %cst_8 : f32 to vector<32x10xf32>
    %22 = arith.select %20, %13, %21 : vector<32x10xi1>, vector<32x10xf32>
    %cst_9 = arith.constant dense<0.000000e+00> : vector<32xf32>
    %23 = vector.multi_reduction <add>, %22, %cst_9 [1] : vector<32x10xf32> to vector<32xf32>
    %24 = vector.shape_cast %23 : vector<32xf32> to vector<32x1xf32>
    %25 = arith.subf %17, %24 : vector<32x1xf32>
    %cst_10 = arith.constant 9.99999974E-5 : f32
    %cst_11 = arith.constant 1.000000e+03 : f32
    %26 = vector.broadcast %cst_10 : f32 to vector<32x1xf32>
    %27 = arith.maximumf %26, %25 : vector<32x1xf32>
    %28 = vector.broadcast %cst_11 : f32 to vector<32x1xf32>
    %29 = arith.minimumf %28, %27 : vector<32x1xf32>
    %cst_12 = arith.constant dense<0.000000e+00> : vector<1xf32>
    %30 = vector.multi_reduction <add>, %29, %cst_12 [0] : vector<32x1xf32> to vector<1xf32>
    %31 = vector.shape_cast %30 : vector<1xf32> to vector<1x1xf32>
    %cst_13 = arith.constant dense<0.000000e+00> : vector<1xf32>
    %32 = vector.multi_reduction <add>, %1, %cst_13 [0] : vector<32x1xf32> to vector<1xf32>
    %33 = vector.shape_cast %32 : vector<1xf32> to vector<1x1xf32>
    %cst_14 = arith.constant 3.125000e-02 : f32
    %34 = vector.broadcast %cst_14 : f32 to vector<1x1xf32>
    %35 = arith.mulf %31, %34 : vector<1x1xf32>
    %36 = vector.broadcast %35 : vector<1x1xf32> to vector<32x1xf32>
    %37 = arith.subf %29, %36 : vector<32x1xf32>
    %cst_15 = arith.constant 3.125000e-02 : f32
    %38 = vector.broadcast %cst_15 : f32 to vector<1x1xf32>
    %39 = arith.mulf %33, %38 : vector<1x1xf32>
    %40 = vector.broadcast %39 : vector<1x1xf32> to vector<32x1xf32>
    %41 = arith.subf %1, %40 : vector<32x1xf32>
    %42 = arith.mulf %37, %41 : vector<32x1xf32>
    %cst_16 = arith.constant dense<0.000000e+00> : vector<1xf32>
    %43 = vector.multi_reduction <add>, %42, %cst_16 [0] : vector<32x1xf32> to vector<1xf32>
    %44 = vector.shape_cast %43 : vector<1xf32> to vector<1x1xf32>
    %cst_17 = arith.constant 3.125000e-02 : f32
    %45 = vector.broadcast %cst_17 : f32 to vector<1x1xf32>
    %46 = arith.mulf %44, %45 : vector<1x1xf32>
    %47 = arith.mulf %37, %37 : vector<32x1xf32>
    %cst_18 = arith.constant dense<0.000000e+00> : vector<1xf32>
    %48 = vector.multi_reduction <add>, %47, %cst_18 [0] : vector<32x1xf32> to vector<1xf32>
    %49 = vector.shape_cast %48 : vector<1xf32> to vector<1x1xf32>
    %cst_19 = arith.constant 0.0322580636 : f32
    %50 = vector.broadcast %cst_19 : f32 to vector<1x1xf32>
    %51 = arith.mulf %49, %50 : vector<1x1xf32>
    %52 = arith.mulf %41, %41 : vector<32x1xf32>
    %cst_20 = arith.constant dense<0.000000e+00> : vector<1xf32>
    %53 = vector.multi_reduction <add>, %52, %cst_20 [0] : vector<32x1xf32> to vector<1xf32>
    %54 = vector.shape_cast %53 : vector<1xf32> to vector<1x1xf32>
    %cst_21 = arith.constant 0.0322580636 : f32
    %55 = vector.broadcast %cst_21 : f32 to vector<1x1xf32>
    %56 = arith.mulf %54, %55 : vector<1x1xf32>
    %57 = arith.mulf %51, %56 : vector<1x1xf32>
    %58 = math.sqrt %57 : vector<1x1xf32>
    %cst_22 = arith.constant 9.99999974E-6 : f32
    %59 = vector.broadcast %cst_22 : f32 to vector<1x1xf32>
    %60 = arith.maximumf %58, %59 : vector<1x1xf32>
    %61 = arith.divf %46, %60 : vector<1x1xf32>
    %cst_23 = arith.constant 3.125000e-02 : f32
    %62 = vector.broadcast %cst_23 : f32 to vector<1x1xf32>
    %63 = arith.mulf %31, %62 : vector<1x1xf32>
    %cst_24 = arith.constant 1.000000e+00 : f32
    %64 = vector.broadcast %cst_24 : f32 to vector<1x1xf32>
    %65 = arith.subf %64, %61 : vector<1x1xf32>
    %cst_25 = arith.constant 9.99999974E-5 : f32
    %66 = vector.broadcast %cst_25 : f32 to vector<1x1xf32>
    %67 = arith.mulf %66, %65 : vector<1x1xf32>
    %68 = arith.addf %63, %67 : vector<1x1xf32>
    %69 = tpu.iota {dimensions = array<i32: 1>} : vector<1x2xi32>
    %c0_i32 = arith.constant 0 : i32
    %70 = vector.broadcast %c0_i32 : i32 to vector<1x2xi32>
    %71 = arith.cmpi eq, %69, %70 : vector<1x2xi32>
    %72 = vector.shape_cast %68 : vector<1x1xf32> to vector<1x1xf32>
    %73 = vector.broadcast %72 : vector<1x1xf32> to vector<1x2xf32>
    %74 = vector.shape_cast %61 : vector<1x1xf32> to vector<1x1xf32>
    %75 = vector.broadcast %74 : vector<1x1xf32> to vector<1x2xf32>
    %76 = arith.select %71, %73, %75 : vector<1x2xi1>, vector<1x2xf32>
    %c0_26 = arith.constant 0 : index
    %c0_27 = arith.constant 0 : index
    %77 = vector.load %arg3[%c0_26, %c0_27] : memref<1x2xf32, #tpu.memory_space<vmem>>, vector<1x2xf32>
    tpu.vector_store %arg3[%c0_26, %c0_27], %76 {strides = array<i32>} : memref<1x2xf32, #tpu.memory_space<vmem>>, vector<1x2xf32>,
    return
  }
}

</mosaic_0001>

<llo_original>
// kernel: tpu_custom_call.1
$region0: #{tpu_custom_call.1}
  #allocation0 [shape = 'u32[]', space=smem, size = 0x4, offset = 0x4, fixed_abs, tag = 'smem constant byte address 0x4 - core index']
  #allocation1 [shape = 'u32[72,128]{1,0:T(1,128)}', space=vmem, size = 0x9000, scoped, tag = 'internal scratch']
  %s0 = inlined_call_operand.vmem [shape: f32[32,10], index: 0, kind: input, shape index: {}]
  %s1 = inlined_call_operand.vmem [shape: f32[32,1], index: 1, kind: input, shape index: {}]
  %s2 = inlined_call_operand.vmem [shape: s32[32,1], index: 2, kind: input, shape index: {}]
  %s3 = inlined_call_operand.hbm [shape: f32[1,2], index: 3, kind: output, shape index: {}]
  %s4 = sld [smem:[#allocation0]]
  $region22: #{tpu_custom_call.1} parent=0
    _
  %s6 = ssub.s32 1, %s4
  %s7 = scalar_select 0, %s6, %s4
  $region1: #{tpu_custom_call.1} parent=0
    #allocation2 [shape = 'u8[512]{0}', space=vmem, size = 0x400, scoped, tag = 'output window, operand 0, single buffered']
    #allocation3 [shape = 's32[1]{0}', space=sflag, size = 0x4, scoped, tag = 'scoped memory for tpu_custom_call.1']
    %8 = vsyncpa [#allocation3], 0
    // Predicated region
    $region2: #{tpu_custom_call.1} parent=1 // pred_check
      _
    $region3: #{tpu_custom_call.1} parent=1 // pred_check_branch
      %10 = sbr.rel (0) target = $region5
    $region4: #{tpu_custom_call.1} parent=1 // pred_region
      _
    $region5: #{tpu_custom_call.1} parent=1 // pred_fallthru
      _
    // Predicated region
    $region6: #{tpu_custom_call.1} parent=1 // pred_check
      _
    $region7: #{tpu_custom_call.1} parent=1 // pred_check_branch
      %12 = sbr.rel (0) target = $region9
    $region8: #{tpu_custom_call.1} parent=1 // pred_region
      _
    $region9: #{tpu_custom_call.1} parent=1 // pred_fallthru
      _
    // Predicated region
    $region10: #{tpu_custom_call.1} parent=1 // pred_check
      _
    $region11: #{tpu_custom_call.1} parent=1 // pred_check_branch
      %14 = sbr.rel (0) target = $region13
    $region12: #{tpu_custom_call.1} parent=1 // pred_region
      _
    $region13: #{tpu_custom_call.1} parent=1 // pred_fallthru
      _
    %v15 = vld [vmem:[%s0] sm:$0xff]
    %v16 = vld [vmem:[%s0 + $0x8] sm:$0xff]
    %v17 = vld [vmem:[%s0 + $0x10] sm:$0xff]
    %v18 = vld [vmem:[%s0 + $0x18] sm:$0xff]
    %v19 = vld [vmem:[%s1] sm:$0xff]
    %v20 = vld [vmem:[%s1 + $0x8] sm:$0xff]
    %v21 = vld [vmem:[%s1 + $0x10] sm:$0xff]
    %v22 = vld [vmem:[%s1 + $0x18] sm:$0xff]
    %v23 = vld [vmem:[%s2] sm:$0xff]
    %v24 = vld [vmem:[%s2 + $0x8] sm:$0xff]
    %v25 = vld [vmem:[%s2 + $0x10] sm:$0xff]
    %v26 = vld [vmem:[%s2 + $0x18] sm:$0xff]
    %vm27 = vcmask 80896
    %v28 = vsel %vm27, %v15, -inf
    %29 = vmax.xlane.f32.xlu0 %v28
    %v30 = vpop.xlane.xlu0 %29
    %v31 = vsel %vm27, %v16, -inf
    %32 = vmax.xlane.f32.xlu0 %v31
    %v33 = vpop.xlane.xlu0 %32
    %v34 = vsel %vm27, %v17, -inf
    %35 = vmax.xlane.f32.xlu0 %v34
    %v36 = vpop.xlane.xlu0 %35
    %v37 = vsel %vm27, %v18, -inf
    %38 = vmax.xlane.f32.xlu0 %v37
    %v39 = vpop.xlane.xlu0 %38
    %v40 = vsub.f32 %v15, %v30
    %v41 = vsub.f32 %v16, %v33
    %v42 = vsub.f32 %v17, %v36
    %v43 = vsub.f32 %v18, %v39
    %v44 = vmul.f32 %v40, 1.442695
    %v45 = vpow.pop %v44
    %v46 = vmul.f32 %v41, 1.442695
    %v47 = vpow.pop %v46
    %v48 = vmul.f32 %v42, 1.442695
    %v49 = vpow.pop %v48
    %v50 = vmul.f32 %v43, 1.442695
    %v51 = vpow.pop %v50
    %v52 = vsel %vm27, %v45, 0.0
    %53 = vadd.xlane.f32.xlu0 %v52
    %v54 = vpop.xlane.xlu0 %53
    %v55 = vsel %vm27, %v47, 0.0
    %56 = vadd.xlane.f32.xlu0 %v55
    %v57 = vpop.xlane.xlu0 %56
    %v58 = vsel %vm27, %v49, 0.0
    %59 = vadd.xlane.f32.xlu0 %v58
    %v60 = vpop.xlane.xlu0 %59
    %v61 = vsel %vm27, %v51, 0.0
    %62 = vadd.xlane.f32.xlu0 %v61
    %v63 = vpop.xlane.xlu0 %62
    %v64 = vrcp.pop %v54
    %v65 = vmul.f32 %v54, %v64
    %v66 = vsub.f32 1.0, %v65
    %v67 = vmul.f32 %v64, %v66
    %v68 = vadd.f32 %v64, %v67
    %vm69 = vweird.f32 %v54
    %vm70 = vweird.f32 %v64
    %vm71 = vmor %vm69, %vm70
    %v72 = vsel %vm71, %v64, %v68
    %v73 = vand.u32 2147483647, %v54
    %vm74 = vcmp.eq.f32.partialorder %v73, 8.507059e+37
    %v75 = vand.u32 %v54, 2147483648
    %v76 = vor.u32 1.1754944e-38, %v75
    %v77 = vsel %vm74, %v76, %v72
    %v78 = vmul.f32 1.0, %v77
    %v79 = vrcp.pop %v57
    %v80 = vmul.f32 %v57, %v79
    %v81 = vsub.f32 1.0, %v80
    %v82 = vmul.f32 %v79, %v81
    %v83 = vadd.f32 %v79, %v82
    %vm84 = vweird.f32 %v57
    %vm85 = vweird.f32 %v79
    %vm86 = vmor %vm84, %vm85
    %v87 = vsel %vm86, %v79, %v83
    %v88 = vand.u32 2147483647, %v57
    %vm89 = vcmp.eq.f32.partialorder %v88, 8.507059e+37
    %v90 = vand.u32 %v57, 2147483648
    %v91 = vor.u32 1.1754944e-38, %v90
    %v92 = vsel %vm89, %v91, %v87
    %v93 = vmul.f32 1.0, %v92
    %v94 = vrcp.pop %v60
    %v95 = vmul.f32 %v60, %v94
    %v96 = vsub.f32 1.0, %v95
    %v97 = vmul.f32 %v94, %v96
    %v98 = vadd.f32 %v94, %v97
    %vm99 = vweird.f32 %v60
    %vm100 = vweird.f32 %v94
    %vm101 = vmor %vm99, %vm100
    %v102 = vsel %vm101, %v94, %v98
    %v103 = vand.u32 2147483647, %v60
    %vm104 = vcmp.eq.f32.partialorder %v103, 8.507059e+37
    %v105 = vand.u32 %v60, 2147483648
    %v106 = vor.u32 1.1754944e-38, %v105
    %v107 = vsel %vm104, %v106, %v102
    %v108 = vmul.f32 1.0, %v107
    %v109 = vrcp.pop %v63
    %v110 = vmul.f32 %v63, %v109
    %v111 = vsub.f32 1.0, %v110
    %v112 = vmul.f32 %v109, %v111
    %v113 = vadd.f32 %v109, %v112
    %vm114 = vweird.f32 %v63
    %vm115 = vweird.f32 %v109
    %vm116 = vmor %vm114, %vm115
    %v117 = vsel %vm116, %v109, %v113
    %v118 = vand.u32 2147483647, %v63
    %vm119 = vcmp.eq.f32.partialorder %v118, 8.507059e+37
    %v120 = vand.u32 %v63, 2147483648
    %v121 = vor.u32 1.1754944e-38, %v120
    %v122 = vsel %vm119, %v121, %v117
    %v123 = vmul.f32 1.0, %v122
    %v124 = vmul.f32 %v45, %v78
    %v125 = vmul.f32 %v47, %v93
    %v126 = vmul.f32 %v49, %v108
    %v127 = vmul.f32 %v51, %v123
    %v128 = vmul.f32 %v124, 1.442695
    %v129 = vpow.pop %v128
    %v130 = vmul.f32 %v125, 1.442695
    %v131 = vpow.pop %v130
    %v132 = vmul.f32 %v126, 1.442695
    %v133 = vpow.pop %v132
    %v134 = vmul.f32 %v127, 1.442695
    %v135 = vpow.pop %v134
    %v136 = vsel %vm27, %v129, 0.0
    %137 = vadd.xlane.f32.xlu0 %v136
    %v138 = vpop.xlane.xlu0 %137
    %v139 = vsel %vm27, %v131, 0.0
    %140 = vadd.xlane.f32.xlu0 %v139
    %v141 = vpop.xlane.xlu0 %140
    %v142 = vsel %vm27, %v133, 0.0
    %143 = vadd.xlane.f32.xlu0 %v142
    %v144 = vpop.xlane.xlu0 %143
    %v145 = vsel %vm27, %v135, 0.0
    %146 = vadd.xlane.f32.xlu0 %v145
    %v147 = vpop.xlane.xlu0 %146
    %v148 = vlog2.pop %v138
    %v149 = vmul.f32 %v148, 0.6931472
    %v150 = vlog2.pop %v141
    %v151 = vmul.f32 %v150, 0.6931472
    %v152 = vlog2.pop %v144
    %v153 = vmul.f32 %v152, 0.6931472
    %v154 = vlog2.pop %v147
    %v155 = vmul.f32 %v154, 0.6931472
    %v156 = vlaneseq
    %v157 = vand.u32 %v156, 127
    %158 = vset.pattern.permute.xlu0 0
    %159 = vperm.xlu0 %158, %v23
    %v160 = vpop.permute.xlu0 %159
    %161 = vset.pattern.permute.xlu0 0
    %162 = vperm.xlu0 %161, %v24
    %v163 = vpop.permute.xlu0 %162
    %164 = vset.pattern.permute.xlu0 0
    %165 = vperm.xlu0 %164, %v25
    %v166 = vpop.permute.xlu0 %165
    %167 = vset.pattern.permute.xlu0 0
    %168 = vperm.xlu0 %167, %v26
    %v169 = vpop.permute.xlu0 %168
    %vm170 = vcmp.eq.s32.totalorder %v157, %v160
    %vm171 = vcmp.eq.s32.totalorder %v157, %v163
    %vm172 = vcmp.eq.s32.totalorder %v157, %v166
    %vm173 = vcmp.eq.s32.totalorder %v157, %v169
    %v174 = vsel %vm170, %v124, 0.0
    %v175 = vsel %vm171, %v125, 0.0
    %v176 = vsel %vm172, %v126, 0.0
    %v177 = vsel %vm173, %v127, 0.0
    %v178 = vsel %vm27, %v174, 0.0
    %179 = vadd.xlane.f32.xlu0 %v178
    %v180 = vpop.xlane.xlu0 %179
    %v181 = vsel %vm27, %v175, 0.0
    %182 = vadd.xlane.f32.xlu0 %v181
    %v183 = vpop.xlane.xlu0 %182
    %v184 = vsel %vm27, %v176, 0.0
    %185 = vadd.xlane.f32.xlu0 %v184
    %v186 = vpop.xlane.xlu0 %185
    %v187 = vsel %vm27, %v177, 0.0
    %188 = vadd.xlane.f32.xlu0 %v187
    %v189 = vpop.xlane.xlu0 %188
    %v190 = vsub.f32 %v149, %v180
    %v191 = vsub.f32 %v151, %v183
    %v192 = vsub.f32 %v153, %v186
    %v193 = vsub.f32 %v155, %v189
    %v194 = vmax.f32 %v190, 0.0001
    %v195 = vmax.f32 %v191, 0.0001
    %v196 = vmax.f32 %v192, 0.0001
    %v197 = vmax.f32 %v193, 0.0001
    %v198 = vmin.f32 %v194, 1000.0
    %v199 = vmin.f32 %v195, 1000.0
    %v200 = vmin.f32 %v196, 1000.0
    %v201 = vmin.f32 %v197, 1000.0
    %v202 = vadd.f32 %v198, %v199
    %v203 = vadd.f32 %v202, %v200
    %v204 = vadd.f32 %v203, %v201
    %v205 = vrot.slane %v204, 4
    %v206 = vadd.f32 %v204, %v205
    %v207 = vrot.slane %v206, 2
    %v208 = vadd.f32 %v206, %v207
    %v209 = vrot.slane %v208, 1
    %v210 = vadd.f32 %v208, %v209
    %vm211 = vcmask 7168
    %v212 = vsel %vm211, %v19, 0.0
    %v213 = vsel %vm211, %v20, 0.0
    %v214 = vadd.f32 %v212, %v213
    %v215 = vsel %vm211, %v21, 0.0
    %v216 = vadd.f32 %v214, %v215
    %v217 = vsel %vm211, %v22, 0.0
    %v218 = vadd.f32 %v216, %v217
    %v219 = vrot.slane %v218, 4
    %v220 = vadd.f32 %v218, %v219
    %v221 = vrot.slane %v220, 2
    %v222 = vadd.f32 %v220, %v221
    %v223 = vrot.slane %v222, 1
    %v224 = vadd.f32 %v222, %v223
    %v225 = vmul.f32 %v210, 0.03125
    %v226 = vsub.f32 %v198, %v225
    %v227 = vsub.f32 %v199, %v225
    %v228 = vsub.f32 %v200, %v225
    %v229 = vsub.f32 %v201, %v225
    %v230 = vmul.f32 %v224, 0.03125
    %v231 = vsub.f32 %v19, %v230
    %v232 = vsub.f32 %v20, %v230
    %v233 = vsub.f32 %v21, %v230
    %v234 = vsub.f32 %v22, %v230
    %v235 = vmul.f32 %v226, %v231
    %v236 = vmul.f32 %v227, %v232
    %v237 = vmul.f32 %v228, %v233
    %v238 = vmul.f32 %v229, %v234
    %v239 = vsel %vm211, %v235, 0.0
    %v240 = vsel %vm211, %v236, 0.0
    %v241 = vadd.f32 %v239, %v240
    %v242 = vsel %vm211, %v237, 0.0
    %v243 = vadd.f32 %v241, %v242
    %v244 = vsel %vm211, %v238, 0.0
    %v245 = vadd.f32 %v243, %v244
    %v246 = vrot.slane %v245, 4
    %v247 = vadd.f32 %v245, %v246
    %v248 = vrot.slane %v247, 2
    %v249 = vadd.f32 %v247, %v248
    %v250 = vrot.slane %v249, 1
    %v251 = vadd.f32 %v249, %v250
    %v252 = vmul.f32 %v251, 0.03125
    %v253 = vmul.f32 %v226, %v226
    %v254 = vmul.f32 %v227, %v227
    %v255 = vmul.f32 %v228, %v228
    %v256 = vmul.f32 %v229, %v229
    %v257 = vadd.f32 %v253, %v254
    %v258 = vadd.f32 %v257, %v255
    %v259 = vadd.f32 %v258, %v256
    %v260 = vrot.slane %v259, 4
    %v261 = vadd.f32 %v259, %v260
    %v262 = vrot.slane %v261, 2
    %v263 = vadd.f32 %v261, %v262
    %v264 = vrot.slane %v263, 1
    %v265 = vadd.f32 %v263, %v264
    %v266 = vmul.f32 %v265, 0.032258064
    %v267 = vmul.f32 %v231, %v231
    %v268 = vmul.f32 %v232, %v232
    %v269 = vmul.f32 %v233, %v233
    %v270 = vmul.f32 %v234, %v234
    %v271 = vsel %vm211, %v267, 0.0
    %v272 = vsel %vm211, %v268, 0.0
    %v273 = vadd.f32 %v271, %v272
    %v274 = vsel %vm211, %v269, 0.0
    %v275 = vadd.f32 %v273, %v274
    %v276 = vsel %vm211, %v270, 0.0
    %v277 = vadd.f32 %v275, %v276
    %v278 = vrot.slane %v277, 4
    %v279 = vadd.f32 %v277, %v278
    %v280 = vrot.slane %v279, 2
    %v281 = vadd.f32 %v279, %v280
    %v282 = vrot.slane %v281, 1
    %v283 = vadd.f32 %v281, %v282
    %v284 = vmul.f32 %v283, 0.032258064
    %v285 = vmul.f32 %v266, %v284
    %v286 = vrsqrt.pop %v285
    %v287 = vmul.f32 %v286, %v285
    %v288 = vmul.f32 %v287, %v286
    %v289 = vmul.f32 0.5, %v288
    %v290 = vsub.f32 1.5, %v289
    %v291 = vmul.f32 %v286, %v290
    %v292 = vmul.f32 %v285, %v291
    %vm293 = vcmp.eq.f32.partialorder %v285, inf
    %v294 = vsel %vm293, %v285, %v292
    %vm295 = vcmp.eq.f32.partialorder %v285, 0.0
    %v296 = vand.u32 %v285, 2147483648
    %v297 = vsel %vm295, %v296, %v294
    %v298 = vmax.f32 %v297, 1e-05
    %v299 = vrcp.pop %v298
    %v300 = vmul.f32 %v298, %v299
    %v301 = vsub.f32 1.0, %v300
    %v302 = vmul.f32 %v299, %v301
    %v303 = vadd.f32 %v299, %v302
    %vm304 = vweird.f32 %v298
    %vm305 = vweird.f32 %v299
    %vm306 = vmor %vm304, %vm305
    %v307 = vsel %vm306, %v299, %v303
    %v308 = vand.u32 2147483647, %v298
    %vm309 = vcmp.eq.f32.partialorder %v308, 8.507059e+37
    %v310 = vand.u32 %v298, 2147483648
    %v311 = vor.u32 1.1754944e-38, %v310
    %v312 = vsel %vm309, %v311, %v307
    %v313 = vmul.f32 %v252, %v312
    %v314 = vsub.f32 1.0, %v313
    %v315 = vmul.f32 %v314, 0.0001
    %v316 = vadd.f32 %v225, %v315
    %vm317 = vcmp.eq.s32.totalorder %v157, 0
    %319 = vset.pattern.permute.xlu0 0
    %320 = vperm.xlu0 %319, %v316
    %v321 = vpop.permute.xlu0 %320
    %324 = vset.pattern.permute.xlu0 0
    %325 = vperm.xlu0 %324, %v313
    %v326 = vpop.permute.xlu0 %325
    %v328 = vsel %vm317, %v321, %v326
    %vm329 = vcmask 8192
    %330 = vst.msk [vmem:[#allocation2] sm:$0x1] %vm329, %v328
    // Predicated region
    $region14: #{tpu_custom_call.1} parent=1 // pred_check
      _
    $region15: #{tpu_custom_call.1} parent=1 // pred_check_branch
      %332 = sbr.rel (0) target = $region17
    $region16: #{tpu_custom_call.1} parent=1 // pred_region
      %334 = vsyncadd [#allocation3], 0
      %s336 = sshll.u32 [#allocation2], 4
      %s337 = int_to_ptr.vmem [resolvable:$true] %s336
      %s338 = sshll.u32 %s3, 4
      %s339 = int_to_ptr.hbm [resolvable:$true] %s338
      %341 = dma.vmem_to_hbm [thread:$0]  %s337, 16, %s339, [#allocation3]
    $region17: #{tpu_custom_call.1} parent=1 // pred_fallthru
      _
    // Predicated region
    $region18: #{tpu_custom_call.1} parent=1 // pred_check
      _
    $region19: #{tpu_custom_call.1} parent=1 // pred_check_branch
      %343 = sbr.rel (0) target = $region21
    $region20: #{tpu_custom_call.1} parent=1 // pred_region
      %345 = dma.done [#allocation3], 16
    $region21: #{tpu_custom_call.1} parent=1 // pred_fallthru
      _
    %346 = vsyncpa [#allocation3], 1

</llo_original>
